<compile_context>
chip_gen: v7x
topology: tpu7x:2x2x1
jax: 0.10.0
libtpu: 0.0.40
codegen_flags: <defaults>
</compile_context>

<pallas_src>
import functools
from typing import Any, NamedTuple

import jax
import jax.numpy as jnp
import numpy as np
from jax.experimental import pallas as pl
from jax.experimental.pallas import tpu as pltpu

LANE = 128


def _round_up(x, m):
    return ((x + m - 1) // m) * m


class PreparedConvParams(NamedTuple):
    max_fs: int
    pmax: int
    D: int
    F_total: int
    F_pad: int
    compute_dtype: Any
    w_taps: jax.Array    # (max_fs, D, F_pad)   compute dtype (per-tap layout)
    w_flat: jax.Array    # (max_fs*D, F_pad)    compute dtype (im2col / folded-K layout)
    bias2d: jax.Array    # (1, F_pad)           float32


def prepare_conv_params(params, compute_dtype=jnp.bfloat16):
    """Fuse every filter into one centered tap stack ONCE (host-side, cache the result).
    params: list of (fs, W(fs, D, F), bias(F,))."""
    for fs, _, _ in params:
        if fs % 2 == 0:
            raise ValueError("filter size cannot be even")   # same contract as the module
    max_fs = max(fs for fs, _, _ in params)
    pmax = (max_fs - 1) // 2
    D = int(params[0][1].shape[1])
    F_total = int(sum(int(W.shape[-1]) for _, W, _ in params))
    F_pad = _round_up(F_total, LANE)

    w = np.zeros((max_fs, D, F_pad), np.float32)
    b = np.zeros((F_pad,), np.float32)
    off = 0
    for fs, W, bias in params:
        F = int(W.shape[-1])
        start = pmax - (fs - 1) // 2          # center this filter inside the max_fs window
        w[start:start + fs, :, off:off + F] = np.asarray(W, np.float32)
        b[off:off + F] = np.asarray(bias, np.float32)
        off += F

    return PreparedConvParams(
        max_fs, pmax, D, F_total, F_pad, jnp.dtype(compute_dtype),
        jnp.asarray(w, dtype=compute_dtype),
        jnp.asarray(w.reshape(max_fs * D, F_pad), dtype=compute_dtype),
        jnp.asarray(b.reshape(1, F_pad), jnp.float32),
    )


def _conv_kernel(x_ref, w_ref, b_ref, o_ref, halo_ref, *, L, TL, max_fs, pmax, fold_taps):
    # x_ref   : (Bt, L, D)  raw input rows for this batch block (resident across L tiles)
    # w_ref   : (max_fs*D, F_pad) folded  OR  (max_fs, D, F_pad) per-tap weights
    # b_ref   : (1, F_pad)  f32 bias
    # o_ref   : (Bt, TL, F_pad) output tile
    # halo_ref: (Bt, Lp + 2*pmax, D) VMEM scratch: zero halo + cast x (no HBM pad pass)
    Bt, _, D = x_ref.shape
    F_pad = o_ref.shape[-1]
    lt = pl.program_id(1)

    @pl.when(lt == 0)                    # fill the halo once per batch block (lt is inner)
    def _():
        halo_ref[...] = jnp.zeros_like(halo_ref)
        halo_ref[:, pmax:pmax + L, :] = x_ref[...].astype(halo_ref.dtype)

    base = pl.multiple_of(lt * TL, 8)    # TL is a multiple of 8
    if fold_taps:
        # im2col fold: one MXU dot with K = max_fs*D (fills MXU K / x lanes when D < 128).
        xt = jnp.concatenate(
            [halo_ref[:, pl.ds(base + k, TL), :] for k in range(max_fs)], axis=-1)
        acc = jnp.dot(xt.reshape(Bt * TL, max_fs * D), w_ref[...],
                      preferred_element_type=jnp.float32)
        acc = acc + b_ref[...]
    else:
        # Per-tap K=D dots (D >= 128 path); bias folded into the accumulator init.
        acc = jnp.broadcast_to(b_ref[...], (Bt * TL, F_pad)).astype(jnp.float32)
        for k in range(max_fs):
            tap = halo_ref[:, pl.ds(base + k, TL), :].reshape(Bt * TL, D)
            acc = acc + jnp.dot(tap, w_ref[k], preferred_element_type=jnp.float32)

    o_ref[...] = acc.reshape(Bt, TL, F_pad).astype(o_ref.dtype)


def _vmem_limit_bytes():
    kind = ""
    try:
        kind = jax.devices()[0].device_kind.lower()
    except Exception:
        pass
    if "v7" in kind or not kind:
        return 48 << 20                   # v7x: 64 MiB / TC -> stay conservative
    if any(s in kind for s in ("v4", "v5", "v6")):
        return 96 << 20                   # 128 MiB physical VMEM generations
    return 48 << 20


def conv_layer_forward(x, prep: PreparedConvParams, *, out_dtype=None,
                       tl_target=128, trim=True):
    """x: (B, L, D).  Returns (B, L, F_total) in out_dtype (default: prep.compute_dtype).
    Set trim=False to get the padded (B, Lp, F_pad) slab (rows >= L / lanes >= F_total
    are padding) and skip the extra HBM slice pass."""
    B, L, D = x.shape
    assert D == prep.D, "input feature dim mismatch"
    cdt = prep.compute_dtype
    odt = jnp.dtype(cdt if out_dtype is None else out_dtype)
    max_fs, pmax, F_pad = prep.max_fs, prep.pmax, prep.F_pad

    # Keep the f32 accumulator's vreg footprint bounded if the filter count ever grows.
    if F_pad > 256:
        tl_target = min(tl_target, 64)

    row_align = 16 if (cdt == jnp.dtype(jnp.bfloat16) and L >= 16) else 8
    TL = min(tl_target, _round_up(L, row_align))     # MXU M rows per L tile, multiple of 8
    Lp = _round_up(L, TL)
    n_lt = Lp // TL

    # Small-L: pack several batch elements per grid step (raises M, fewer grid steps).
    if n_lt == 1:
        bt_cap = max(1, min(B, 128 // TL))
        Bt = max(d for d in range(1, bt_cap + 1) if B % d == 0)
    else:
        Bt = 1
    grid = (B // Bt, n_lt)

    esz = jnp.dtype(cdt).itemsize
    cost = pl.CostEstimate(
        flops=2 * B * Lp * max_fs * D * F_pad,
        transcendentals=0,
        bytes_accessed=(B * L * D * x.dtype.itemsize
                        + max_fs * D * F_pad * esz + F_pad * 4
                        + B * Lp * F_pad * odt.itemsize),
    )
    cparams = pltpu.CompilerParams(
        # x's block index depends only on the batch axis: shard batch across TensorCores,
        # keep L tiles sequential so both cores don't each fetch/hold the whole x slab.
        dimension_semantics=("parallel", "arbitrary"),
        vmem_limit_bytes=_vmem_limit_bytes(),
    )
    scratch = [pltpu.VMEM((Bt, Lp + 2 * pmax, D), cdt)]
    out_shape = jax.ShapeDtypeStruct((B, Lp, F_pad), odt)

    def run(fold_taps, single_buffer_consts):
        w = prep.w_flat if fold_taps else prep.w_taps
        const_kw = dict(pipeline_mode=pl.Buffered(1)) if single_buffer_consts else {}
        kern = functools.partial(_conv_kernel, L=L, TL=TL, max_fs=max_fs, pmax=pmax,
                                 fold_taps=fold_taps)
        return pl.pallas_call(
            kern,
            out_shape=out_shape,
            grid=grid,
            in_specs=[
                pl.BlockSpec((Bt, L, D), lambda bb, lt: (bb, 0, 0)),
                pl.BlockSpec(w.shape, lambda bb, lt: (0,) * w.ndim, **const_kw),
                pl.BlockSpec((1, F_pad), lambda bb, lt: (0, 0), **const_kw),
            ],
            out_specs=pl.BlockSpec((Bt, TL, F_pad), lambda bb, lt: (bb, lt, 0)),
            scratch_shapes=scratch,
            compiler_params=cparams,
            cost_estimate=cost,
        )(x, w, prep.bias2d)

    try:
        # Preferred config: folded-K single dot (when D < 128) + single-buffered constants.
        out = run(fold_taps=(D < 128), single_buffer_consts=True)
    except Exception:
        # TODO(synk): drop this fallback once minor-dim concatenate and pl.Buffered(1)
        # are confirmed on the target toolchain; it reruns with per-tap dots + defaults.
        out = run(fold_taps=False, single_buffer_consts=False)

    if not trim:
        return out
    return out[:, :L, :prep.F_total]


def conv_layer_ref(x, params):
    """Pure-JAX reference (same math as PyTorch ConvLayer.forward), high precision."""
    B, L, D = x.shape
    outs = []
    for fs, W, bias in params:
        pad = (fs - 1) // 2
        xpad = jnp.pad(x, ((0, 0), (pad, pad), (0, 0)))
        o = jnp.zeros((B, L, W.shape[-1]), jnp.float32)
        for k in range(fs):
            o = o + jnp.einsum("bld,df->blf", xpad[:, k:k + L, :], W[k],
                               precision=jax.lax.Precision.HIGHEST)
        outs.append(o + bias[None, None, :])
    return jnp.concatenate(outs, axis=-1)


def init_params(key, input_dim, filter_mapping):
    """Deterministic synthetic weights shaped like nn.Conv2d(1, F, (fs, D))."""
    params = []
    for fs, nf in sorted(filter_mapping.items()):
        key, kw, kb = jax.random.split(key, 3)
        bound = 1.0 / jnp.sqrt(fs * input_dim)
        w_t = jax.random.uniform(kw, (nf, 1, fs, input_dim),
                                 minval=-bound, maxval=bound, dtype=jnp.float32)
        W = jnp.transpose(w_t[:, 0], (1, 2, 0))          # (fs, D, F) tap-major
        b = jax.random.uniform(kb, (nf,), minval=-bound, maxval=bound, dtype=jnp.float32)
        params.append((fs, W, b))
    return params


if __name__ == "__main__":
    B, L, D = 2, 8, 32
    filter_mapping = {3: 4, 5: 6}             # odd filter sizes only (module requires it)

    key = jax.random.PRNGKey(0)
    kx, kp = jax.random.split(key)
    x = jax.random.normal(kx, (B, L, D), dtype=jnp.float32)
    params = init_params(kp, D, filter_mapping)

    ref = conv_layer_ref(x, params)
    F_total = sum(filter_mapping.values())

    # f32 operands + f32 output: structural-parity check against the reference.
    prep32 = prepare_conv_params(params, compute_dtype=jnp.float32)
    out32 = jax.block_until_ready(conv_layer_forward(x, prep32, out_dtype=jnp.float32))
    assert out32.shape == (B, L, F_total), out32.shape
    assert jnp.allclose(out32, ref, atol=1e-2, rtol=1e-3), "f32 mismatch vs reference"

    # bf16 operands + bf16 output (recommended perf path): f32 MXU accumulation.
    prep16 = prepare_conv_params(params, compute_dtype=jnp.bfloat16)
    out16 = jax.block_until_ready(conv_layer_forward(x, prep16))
    assert out16.shape == (B, L, F_total), out16.shape
    assert out16.dtype == jnp.dtype(jnp.bfloat16)
    assert jnp.allclose(out16.astype(jnp.float32), ref, atol=5e-2, rtol=5e-2), \
        "bf16 mismatch vs reference"

    print("KERNEL_OK")
</pallas_src>

<mosaic_0001>
module attributes {stable_mosaic.version = 11 : i64} {
  func.func @_conv_kernel(%arg0: i32, %arg1: i32, %arg2: memref<2x8x32xf32, #tpu.memory_space<vmem>>, %arg3: memref<160x128xf32, #tpu.memory_space<vmem>>, %arg4: memref<1x128xf32, #tpu.memory_space<vmem>>, %arg5: memref<2x8x128xf32, #tpu.memory_space<vmem>>, %arg6: memref<2x12x32xf32, #tpu.memory_space<vmem>>) attributes {dimension_semantics = [#tpu.dimension_semantics<parallel>, #tpu.dimension_semantics<arbitrary>], iteration_bounds = array<i64: 1, 1>, scalar_prefetch = 0 : i64, scratch_operands = 1 : i64, tpu.core_type = #tpu.core_type<tc>, window_params = [{transform_indices = @transform_0, window_bounds = array<i64: 2, 8, 32>}, {pipeline_mode = #tpu.pipeline_mode<synchronous>, transform_indices = @transform_1, window_bounds = array<i64: 160, 128>}, {pipeline_mode = #tpu.pipeline_mode<synchronous>, transform_indices = @transform_2, window_bounds = array<i64: 1, 128>}, {transform_indices = @transform_3, window_bounds = array<i64: 2, 8, 128>}]} {
    %c0_i32 = arith.constant 0 : i32
    %0 = arith.cmpi eq, %arg1, %c0_i32 : i32
    %1 = arith.extui %0 : i1 to i32
    %c0_i32_0 = arith.constant 0 : i32
    %2 = arith.cmpi ne, %1, %c0_i32_0 : i32
    scf.if %2 {
      %cst_18 = arith.constant 0.000000e+00 : f32
      %29 = vector.broadcast %cst_18 : f32 to vector<2x12x32xf32>
      %c0_19 = arith.constant 0 : index
      %c0_20 = arith.constant 0 : index
      %c0_21 = arith.constant 0 : index
      %30 = vector.load %arg6[%c0_19, %c0_20, %c0_21] : memref<2x12x32xf32, #tpu.memory_space<vmem>>, vector<2x12x32xf32>
      tpu.vector_store %arg6[%c0_19, %c0_20, %c0_21], %29 {strides = array<i32>} : memref<2x12x32xf32, #tpu.memory_space<vmem>>, vector<2x12x32xf32>,
      %c0_22 = arith.constant 0 : index
      %c0_23 = arith.constant 0 : index
      %c0_24 = arith.constant 0 : index
      %31 = vector.load %arg2[%c0_22, %c0_23, %c0_24] : memref<2x8x32xf32, #tpu.memory_space<vmem>>, vector<2x8x32xf32>
      %c0_25 = arith.constant 0 : index
      %c2 = arith.constant 2 : index
      %c0_26 = arith.constant 0 : index
      %32 = vector.load %arg6[%c0_25, %c2, %c0_26] : memref<2x12x32xf32, #tpu.memory_space<vmem>>, vector<2x8x32xf32>
      tpu.vector_store %arg6[%c0_25, %c2, %c0_26], %31 {strides = array<i32>} : memref<2x12x32xf32, #tpu.memory_space<vmem>>, vector<2x8x32xf32>,
    } else {
    }
    %c8_i32 = arith.constant 8 : i32
    %3 = arith.muli %arg1, %c8_i32 : i32
    %4 = tpu.assume_multiple %3, 8 : i32
    %c0_i32_1 = arith.constant 0 : i32
    %5 = arith.addi %4, %c0_i32_1 : i32
    %c0 = arith.constant 0 : index
    %6 = arith.index_cast %5 : i32 to index
    %c0_2 = arith.constant 0 : index
    %7 = vector.load %arg6[%c0, %6, %c0_2] : memref<2x12x32xf32, #tpu.memory_space<vmem>>, vector<2x8x32xf32>
    %c1_i32 = arith.constant 1 : i32
    %8 = arith.addi %4, %c1_i32 : i32
    %c0_3 = arith.constant 0 : index
    %9 = arith.index_cast %8 : i32 to index
    %c0_4 = arith.constant 0 : index
    %10 = vector.load %arg6[%c0_3, %9, %c0_4] : memref<2x12x32xf32, #tpu.memory_space<vmem>>, vector<2x8x32xf32>
    %c2_i32 = arith.constant 2 : i32
    %11 = arith.addi %4, %c2_i32 : i32
    %c0_5 = arith.constant 0 : index
    %12 = arith.index_cast %11 : i32 to index
    %c0_6 = arith.constant 0 : index
    %13 = vector.load %arg6[%c0_5, %12, %c0_6] : memref<2x12x32xf32, #tpu.memory_space<vmem>>, vector<2x8x32xf32>
    %c3_i32 = arith.constant 3 : i32
    %14 = arith.addi %4, %c3_i32 : i32
    %c0_7 = arith.constant 0 : index
    %15 = arith.index_cast %14 : i32 to index
    %c0_8 = arith.constant 0 : index
    %16 = vector.load %arg6[%c0_7, %15, %c0_8] : memref<2x12x32xf32, #tpu.memory_space<vmem>>, vector<2x8x32xf32>
    %c4_i32 = arith.constant 4 : i32
    %17 = arith.addi %4, %c4_i32 : i32
    %c0_9 = arith.constant 0 : index
    %18 = arith.index_cast %17 : i32 to index
    %c0_10 = arith.constant 0 : index
    %19 = vector.load %arg6[%c0_9, %18, %c0_10] : memref<2x12x32xf32, #tpu.memory_space<vmem>>, vector<2x8x32xf32>
    %20 = tpu.concatenate %7, %10, %13, %16, %19 in 2 : vector<2x8x32xf32>, vector<2x8x32xf32>, vector<2x8x32xf32>, vector<2x8x32xf32>, vector<2x8x32xf32> -> vector<2x8x160xf32>
    %21 = vector.shape_cast %20 : vector<2x8x160xf32> to vector<16x160xf32>
    %c0_11 = arith.constant 0 : index
    %c0_12 = arith.constant 0 : index
    %22 = vector.load %arg3[%c0_11, %c0_12] : memref<160x128xf32, #tpu.memory_space<vmem>>, vector<160x128xf32>
    %cst = arith.constant dense<0.000000e+00> : vector<16x128xf32>
    %23 = tpu.matmul %21, %22, %cst {dimension_numbers = #tpu.dot_dimension_numbers<[1], [0], [0], [1], [0, 0, 1, 1], [], []>} : vector<16x160xf32>, vector<160x128xf32>, vector<16x128xf32> -> vector<16x128xf32>
    %c0_13 = arith.constant 0 : index
    %c0_14 = arith.constant 0 : index
    %24 = vector.load %arg4[%c0_13, %c0_14] : memref<1x128xf32, #tpu.memory_space<vmem>>, vector<1x128xf32>
    %25 = vector.broadcast %24 : vector<1x128xf32> to vector<16x128xf32>
    %26 = arith.addf %23, %25 : vector<16x128xf32>
    %27 = vector.shape_cast %26 : vector<16x128xf32> to vector<2x8x128xf32>
    %c0_15 = arith.constant 0 : index
    %c0_16 = arith.constant 0 : index
    %c0_17 = arith.constant 0 : index
    %28 = vector.load %arg5[%c0_15, %c0_16, %c0_17] : memref<2x8x128xf32, #tpu.memory_space<vmem>>, vector<2x8x128xf32>
    tpu.vector_store %arg5[%c0_15, %c0_16, %c0_17], %27 {strides = array<i32>} : memref<2x8x128xf32, #tpu.memory_space<vmem>>, vector<2x8x128xf32>,
    return
  }
  func.func @transform_0(%arg0: i32, %arg1: i32) -> (i32, i32, i32) {
    %c0_i32 = arith.constant 0 : i32
    %c0_i32_0 = arith.constant 0 : i32
    %c0_i32_1 = arith.constant 0 : i32
    return %arg0, %c0_i32, %c0_i32_0 : i32, i32, i32
  }
  func.func @transform_1(%arg0: i32, %arg1: i32) -> (i32, i32) {
    %c0_i32 = arith.constant 0 : i32
    %c0_i32_0 = arith.constant 0 : i32
    %c0_i32_1 = arith.constant 0 : i32
    return %c0_i32, %c0_i32_0 : i32, i32
  }
  func.func @transform_2(%arg0: i32, %arg1: i32) -> (i32, i32) {
    %c0_i32 = arith.constant 0 : i32
    %c0_i32_0 = arith.constant 0 : i32
    %c0_i32_1 = arith.constant 0 : i32
    return %c0_i32, %c0_i32_0 : i32, i32
  }
  func.func @transform_3(%arg0: i32, %arg1: i32) -> (i32, i32, i32) {
    %c0_i32 = arith.constant 0 : i32
    %c0_i32_0 = arith.constant 0 : i32
    return %arg0, %arg1, %c0_i32 : i32, i32, i32
  }
}

module attributes {stable_mosaic.version = 11 : i64} {
  func.func @_conv_kernel(%arg0: i32, %arg1: i32, %arg2: memref<2x8x32xf32, #tpu.memory_space<vmem>>, %arg3: memref<5x32x128xf32, #tpu.memory_space<vmem>>, %arg4: memref<1x128xf32, #tpu.memory_space<vmem>>, %arg5: memref<2x8x128xf32, #tpu.memory_space<vmem>>, %arg6: memref<2x12x32xf32, #tpu.memory_space<vmem>>) attributes {dimension_semantics = [#tpu.dimension_semantics<parallel>, #tpu.dimension_semantics<arbitrary>], iteration_bounds = array<i64: 1, 1>, scalar_prefetch = 0 : i64, scratch_operands = 1 : i64, tpu.core_type = #tpu.core_type<tc>, window_params = [{transform_indices = @transform_0, window_bounds = array<i64: 2, 8, 32>}, {pipeline_mode = #tpu.pipeline_mode<synchronous>, transform_indices = @transform_1, window_bounds = array<i64: 5, 32, 128>}, {pipeline_mode = #tpu.pipeline_mode<synchronous>, transform_indices = @transform_2, window_bounds = array<i64: 1, 128>}, {transform_indices = @transform_3, window_bounds = array<i64: 2, 8, 128>}]} {
    %c0_i32 = arith.constant 0 : i32
    %0 = arith.cmpi eq, %arg1, %c0_i32 : i32
    %1 = arith.extui %0 : i1 to i32
    %c0_i32_0 = arith.constant 0 : i32
    %2 = arith.cmpi ne, %1, %c0_i32_0 : i32
    scf.if %2 {
      %cst_31 = arith.constant 0.000000e+00 : f32
      %50 = vector.broadcast %cst_31 : f32 to vector<2x12x32xf32>
      %c0_32 = arith.constant 0 : index
      %c0_33 = arith.constant 0 : index
      %c0_34 = arith.constant 0 : index
      %51 = vector.load %arg6[%c0_32, %c0_33, %c0_34] : memref<2x12x32xf32, #tpu.memory_space<vmem>>, vector<2x12x32xf32>
      tpu.vector_store %arg6[%c0_32, %c0_33, %c0_34], %50 {strides = array<i32>} : memref<2x12x32xf32, #tpu.memory_space<vmem>>, vector<2x12x32xf32>,
      %c0_35 = arith.constant 0 : index
      %c0_36 = arith.constant 0 : index
      %c0_37 = arith.constant 0 : index
      %52 = vector.load %arg2[%c0_35, %c0_36, %c0_37] : memref<2x8x32xf32, #tpu.memory_space<vmem>>, vector<2x8x32xf32>
      %c0_38 = arith.constant 0 : index
      %c2_39 = arith.constant 2 : index
      %c0_40 = arith.constant 0 : index
      %53 = vector.load %arg6[%c0_38, %c2_39, %c0_40] : memref<2x12x32xf32, #tpu.memory_space<vmem>>, vector<2x8x32xf32>
      tpu.vector_store %arg6[%c0_38, %c2_39, %c0_40], %52 {strides = array<i32>} : memref<2x12x32xf32, #tpu.memory_space<vmem>>, vector<2x8x32xf32>,
    } else {
    }
    %c8_i32 = arith.constant 8 : i32
    %3 = arith.muli %arg1, %c8_i32 : i32
    %4 = tpu.assume_multiple %3, 8 : i32
    %c0 = arith.constant 0 : index
    %c0_1 = arith.constant 0 : index
    %5 = vector.load %arg4[%c0, %c0_1] : memref<1x128xf32, #tpu.memory_space<vmem>>, vector<1x128xf32>
    %6 = vector.shape_cast %5 : vector<1x128xf32> to vector<1x128xf32>
    %7 = vector.broadcast %6 : vector<1x128xf32> to vector<16x128xf32>
    %c0_i32_2 = arith.constant 0 : i32
    %8 = arith.addi %4, %c0_i32_2 : i32
    %c0_3 = arith.constant 0 : index
    %9 = arith.index_cast %8 : i32 to index
    %c0_4 = arith.constant 0 : index
    %10 = vector.load %arg6[%c0_3, %9, %c0_4] : memref<2x12x32xf32, #tpu.memory_space<vmem>>, vector<2x8x32xf32>
    %11 = vector.shape_cast %10 : vector<2x8x32xf32> to vector<16x32xf32>
    %c0_5 = arith.constant 0 : index
    %c0_6 = arith.constant 0 : index
    %c0_7 = arith.constant 0 : index
    %12 = vector.load %arg3[%c0_5, %c0_6, %c0_7] : memref<5x32x128xf32, #tpu.memory_space<vmem>>, vector<1x32x128xf32>
    %13 = vector.shape_cast %12 : vector<1x32x128xf32> to vector<32x128xf32>
    %cst = arith.constant dense<0.000000e+00> : vector<16x128xf32>
    %14 = tpu.matmul %11, %13, %cst {dimension_numbers = #tpu.dot_dimension_numbers<[1], [0], [0], [1], [0, 0, 1, 1], [], []>} : vector<16x32xf32>, vector<32x128xf32>, vector<16x128xf32> -> vector<16x128xf32>
    %15 = arith.addf %7, %14 : vector<16x128xf32>
    %c1_i32 = arith.constant 1 : i32
    %16 = arith.addi %4, %c1_i32 : i32
    %c0_8 = arith.constant 0 : index
    %17 = arith.index_cast %16 : i32 to index
    %c0_9 = arith.constant 0 : index
    %18 = vector.load %arg6[%c0_8, %17, %c0_9] : memref<2x12x32xf32, #tpu.memory_space<vmem>>, vector<2x8x32xf32>
    %19 = vector.shape_cast %18 : vector<2x8x32xf32> to vector<16x32xf32>
    %c1 = arith.constant 1 : index
    %c0_10 = arith.constant 0 : index
    %c0_11 = arith.constant 0 : index
    %20 = vector.load %arg3[%c1, %c0_10, %c0_11] : memref<5x32x128xf32, #tpu.memory_space<vmem>>, vector<1x32x128xf32>
    %21 = vector.shape_cast %20 : vector<1x32x128xf32> to vector<32x128xf32>
    %cst_12 = arith.constant dense<0.000000e+00> : vector<16x128xf32>
    %22 = tpu.matmul %19, %21, %cst_12 {dimension_numbers = #tpu.dot_dimension_numbers<[1], [0], [0], [1], [0, 0, 1, 1], [], []>} : vector<16x32xf32>, vector<32x128xf32>, vector<16x128xf32> -> vector<16x128xf32>
    %23 = arith.addf %15, %22 : vector<16x128xf32>
    %c2_i32 = arith.constant 2 : i32
    %24 = arith.addi %4, %c2_i32 : i32
    %c0_13 = arith.constant 0 : index
    %25 = arith.index_cast %24 : i32 to index
    %c0_14 = arith.constant 0 : index
    %26 = vector.load %arg6[%c0_13, %25, %c0_14] : memref<2x12x32xf32, #tpu.memory_space<vmem>>, vector<2x8x32xf32>
    %27 = vector.shape_cast %26 : vector<2x8x32xf32> to vector<16x32xf32>
    %c2 = arith.constant 2 : index
    %c0_15 = arith.constant 0 : index
    %c0_16 = arith.constant 0 : index
    %28 = vector.load %arg3[%c2, %c0_15, %c0_16] : memref<5x32x128xf32, #tpu.memory_space<vmem>>, vector<1x32x128xf32>
    %29 = vector.shape_cast %28 : vector<1x32x128xf32> to vector<32x128xf32>
    %cst_17 = arith.constant dense<0.000000e+00> : vector<16x128xf32>
    %30 = tpu.matmul %27, %29, %cst_17 {dimension_numbers = #tpu.dot_dimension_numbers<[1], [0], [0], [1], [0, 0, 1, 1], [], []>} : vector<16x32xf32>, vector<32x128xf32>, vector<16x128xf32> -> vector<16x128xf32>
    %31 = arith.addf %23, %30 : vector<16x128xf32>
    %c3_i32 = arith.constant 3 : i32
    %32 = arith.addi %4, %c3_i32 : i32
    %c0_18 = arith.constant 0 : index
    %33 = arith.index_cast %32 : i32 to index
    %c0_19 = arith.constant 0 : index
    %34 = vector.load %arg6[%c0_18, %33, %c0_19] : memref<2x12x32xf32, #tpu.memory_space<vmem>>, vector<2x8x32xf32>
    %35 = vector.shape_cast %34 : vector<2x8x32xf32> to vector<16x32xf32>
    %c3 = arith.constant 3 : index
    %c0_20 = arith.constant 0 : index
    %c0_21 = arith.constant 0 : index
    %36 = vector.load %arg3[%c3, %c0_20, %c0_21] : memref<5x32x128xf32, #tpu.memory_space<vmem>>, vector<1x32x128xf32>
    %37 = vector.shape_cast %36 : vector<1x32x128xf32> to vector<32x128xf32>
    %cst_22 = arith.constant dense<0.000000e+00> : vector<16x128xf32>
    %38 = tpu.matmul %35, %37, %cst_22 {dimension_numbers = #tpu.dot_dimension_numbers<[1], [0], [0], [1], [0, 0, 1, 1], [], []>} : vector<16x32xf32>, vector<32x128xf32>, vector<16x128xf32> -> vector<16x128xf32>
    %39 = arith.addf %31, %38 : vector<16x128xf32>
    %c4_i32 = arith.constant 4 : i32
    %40 = arith.addi %4, %c4_i32 : i32
    %c0_23 = arith.constant 0 : index
    %41 = arith.index_cast %40 : i32 to index
    %c0_24 = arith.constant 0 : index
    %42 = vector.load %arg6[%c0_23, %41, %c0_24] : memref<2x12x32xf32, #tpu.memory_space<vmem>>, vector<2x8x32xf32>
    %43 = vector.shape_cast %42 : vector<2x8x32xf32> to vector<16x32xf32>
    %c4 = arith.constant 4 : index
    %c0_25 = arith.constant 0 : index
    %c0_26 = arith.constant 0 : index
    %44 = vector.load %arg3[%c4, %c0_25, %c0_26] : memref<5x32x128xf32, #tpu.memory_space<vmem>>, vector<1x32x128xf32>
    %45 = vector.shape_cast %44 : vector<1x32x128xf32> to vector<32x128xf32>
    %cst_27 = arith.constant dense<0.000000e+00> : vector<16x128xf32>
    %46 = tpu.matmul %43, %45, %cst_27 {dimension_numbers = #tpu.dot_dimension_numbers<[1], [0], [0], [1], [0, 0, 1, 1], [], []>} : vector<16x32xf32>, vector<32x128xf32>, vector<16x128xf32> -> vector<16x128xf32>
    %47 = arith.addf %39, %46 : vector<16x128xf32>
    %48 = vector.shape_cast %47 : vector<16x128xf32> to vector<2x8x128xf32>
    %c0_28 = arith.constant 0 : index
    %c0_29 = arith.constant 0 : index
    %c0_30 = arith.constant 0 : index
    %49 = vector.load %arg5[%c0_28, %c0_29, %c0_30] : memref<2x8x128xf32, #tpu.memory_space<vmem>>, vector<2x8x128xf32>
    tpu.vector_store %arg5[%c0_28, %c0_29, %c0_30], %48 {strides = array<i32>} : memref<2x8x128xf32, #tpu.memory_space<vmem>>, vector<2x8x128xf32>,
    return
  }
  func.func @transform_0(%arg0: i32, %arg1: i32) -> (i32, i32, i32) {
    %c0_i32 = arith.constant 0 : i32
    %c0_i32_0 = arith.constant 0 : i32
    %c0_i32_1 = arith.constant 0 : i32
    return %arg0, %c0_i32, %c0_i32_0 : i32, i32, i32
  }
  func.func @transform_1(%arg0: i32, %arg1: i32) -> (i32, i32, i32) {
    %c0_i32 = arith.constant 0 : i32
    %c0_i32_0 = arith.constant 0 : i32
    %c0_i32_1 = arith.constant 0 : i32
    %c0_i32_2 = arith.constant 0 : i32
    return %c0_i32, %c0_i32_0, %c0_i32_1 : i32, i32, i32
  }
  func.func @transform_2(%arg0: i32, %arg1: i32) -> (i32, i32) {
    %c0_i32 = arith.constant 0 : i32
    %c0_i32_0 = arith.constant 0 : i32
    %c0_i32_1 = arith.constant 0 : i32
    return %c0_i32, %c0_i32_0 : i32, i32
  }
  func.func @transform_3(%arg0: i32, %arg1: i32) -> (i32, i32, i32) {
    %c0_i32 = arith.constant 0 : i32
    %c0_i32_0 = arith.constant 0 : i32
    return %arg0, %arg1, %c0_i32 : i32, i32, i32
  }
}

</mosaic_0001>

<llo_original>
// kernel: tpu_custom_call.1
$region0: #{tpu_custom_call.1}
  #allocation0 [shape = 'u32[]', space=smem, size = 0x4, offset = 0x4, fixed_abs, tag = 'smem constant byte address 0x4 - core index']
  #allocation1 [shape = 'u32[144,128]{1,0:T(1,128)}', space=vmem, size = 0x12000, scoped, tag = 'internal scratch']
  #allocation2 [shape = 'f32[2,12,32]{2,1,0:T(8,128)}', space=vmem, size = 0x4000, scoped, tag = 'scratch operand']
  %s0 = inlined_call_operand.hbm [shape: f32[2,8,32], index: 0, kind: input, shape index: {}]
  %s1 = inlined_call_operand.hbm [shape: f32[160,128], index: 1, kind: input, shape index: {}]
  %s2 = inlined_call_operand.vmem [shape: f32[1,128], index: 2, kind: input, shape index: {}]
  %s3 = inlined_call_operand.hbm [shape: f32[2,8,128], index: 3, kind: output, shape index: {}]
  %s4 = sld [smem:[#allocation0]]
  $region34: #{tpu_custom_call.1} parent=0
    _
  %s6 = ssub.s32 1, %s4
  %s7 = scalar_select 0, %s6, %s4
  $region1: #{tpu_custom_call.1} parent=0
    #allocation3 [shape = 'u8[8192]{0}', space=vmem, size = 0x2000, scoped, tag = 'input window, operand 0, single buffered']
    #allocation4 [shape = 's32[1]{0}', space=sflag, size = 0x4, scoped, tag = 'scoped memory for tpu_custom_call.1']
    #allocation5 [shape = 's32[1]{0}', space=sflag, size = 0x4, scoped, tag = 'scoped memory for tpu_custom_call.1']
    #allocation6 [shape = 'u8[81920]{0}', space=vmem, size = 0x14000, scoped, tag = 'input window, operand 1, single buffered']
    #allocation7 [shape = 's32[1]{0}', space=sflag, size = 0x4, scoped, tag = 'scoped memory for tpu_custom_call.1']
    #allocation8 [shape = 'u8[8192]{0}', space=vmem, size = 0x2000, scoped, tag = 'output window, operand 0, single buffered']
    %8 = vsyncpa [#allocation4], 0
    %9 = vsyncpa [#allocation7], 0
    %10 = vsyncpa [#allocation5], 0
    // Predicated region
    $region2: #{tpu_custom_call.1} parent=1 // pred_check
      _
    $region3: #{tpu_custom_call.1} parent=1 // pred_check_branch
      %12 = sbr.rel (0) target = $region5
    $region4: #{tpu_custom_call.1} parent=1 // pred_region
      %s14 = ssub.s32 256, 256
      %15 = vsyncadd [#allocation4], %s14
      %s16 = sshll.u32 [#allocation3], 4
      %s17 = int_to_ptr.vmem [resolvable:$true] %s16
      %22 = dma.hbm_to_vmem [thread:$0]  %s0, 256, %s17, [#allocation4], 128, 128, 8
    $region5: #{tpu_custom_call.1} parent=1 // pred_fallthru
      _
    // Predicated region
    $region6: #{tpu_custom_call.1} parent=1 // pred_check
      _
    $region7: #{tpu_custom_call.1} parent=1 // pred_check_branch
      %24 = sbr.rel (0) target = $region9
    $region8: #{tpu_custom_call.1} parent=1 // pred_region
      %s26 = ssub.s32 2560, 2560
      %27 = vsyncadd [#allocation7], %s26
      %s28 = sshll.u32 [#allocation6], 4
      %s29 = int_to_ptr.vmem [resolvable:$true] %s28
      %34 = dma.hbm_to_vmem [thread:$0]  %s1, 2560, %s29, [#allocation7], 128, 128, 8
    $region9: #{tpu_custom_call.1} parent=1 // pred_fallthru
      _
    // Predicated region
    $region10: #{tpu_custom_call.1} parent=1 // pred_check
      _
    $region11: #{tpu_custom_call.1} parent=1 // pred_check_branch
      %36 = sbr.rel (0) target = $region13
    $region12: #{tpu_custom_call.1} parent=1 // pred_region
      _
    $region13: #{tpu_custom_call.1} parent=1 // pred_fallthru
      _
    // Predicated region
    $region14: #{tpu_custom_call.1} parent=1 // pred_check
      _
    $region15: #{tpu_custom_call.1} parent=1 // pred_check_branch
      %38 = sbr.rel (0) target = $region17
    $region16: #{tpu_custom_call.1} parent=1 // pred_region
      %39 = dma.done [#allocation4], 256
    $region17: #{tpu_custom_call.1} parent=1 // pred_fallthru
      _
    // Predicated region
    $region18: #{tpu_custom_call.1} parent=1 // pred_check
      _
    $region19: #{tpu_custom_call.1} parent=1 // pred_check_branch
      %41 = sbr.rel (0) target = $region21
    $region20: #{tpu_custom_call.1} parent=1 // pred_region
      %42 = dma.done [#allocation7], 2560
    $region21: #{tpu_custom_call.1} parent=1 // pred_fallthru
      _
    %p43 = scmp.eq.s32.totalorder 0, 0
    // Predicated region
    $region22: #{tpu_custom_call.1} parent=1 // pred_check
      %p44 = pneg %p43
    $region23: #{tpu_custom_call.1} parent=1 // pred_check_branch
      %46 = sbr.rel (%p44) target = $region25
    $region24: #{tpu_custom_call.1} parent=1 // pred_region
      %vm47 = vcmask 261120
      %48 = vst.msk [vmem:[#allocation2] sm:$0xff] %vm47, 0.0
      %vm49 = vcmask 257024
      %50 = vst.msk [vmem:[#allocation2 + $0x8] sm:$0xf] %vm49, 0.0
      %51 = vst.msk [vmem:[#allocation2 + $0x10] sm:$0xff] %vm47, 0.0
      %52 = vst.msk [vmem:[#allocation2 + $0x18] sm:$0xf] %vm49, 0.0
      %v53 = vld [vmem:[#allocation3] sm:$0xff]
      %v54 = vld [vmem:[#allocation3 + $0x8] sm:$0xff]
      %55 = vst.msk [vmem:[#allocation2 + $0x2] sm:$0xff] %vm47, %v53
      %56 = vst.msk [vmem:[#allocation2 + $0x12] sm:$0xff] %vm47, %v54
    $region25: #{tpu_custom_call.1} parent=1 // pred_fallthru
      _
    %s57 = smul.u32 0, 8
    %s58 = scalar_lea.vmem [#allocation2], %s57
    %v59 = vld [vmem:[%s58] sm:$0xff]
    %v60 = vld [vmem:[%s58 + $0x10] sm:$0xff]
    %s61 = sadd.s32 %s57, 1
    %s62 = scalar_lea.vmem [#allocation2], %s61
    %v63 = vld [vmem:[%s62] sm:$0xff]
    %v64 = vld [vmem:[%s62 + $0x10] sm:$0xff]
    %s65 = sadd.s32 %s57, 2
    %s66 = scalar_lea.vmem [#allocation2], %s65
    %v67 = vld [vmem:[%s66] sm:$0xff]
    %v68 = vld [vmem:[%s66 + $0x10] sm:$0xff]
    %s69 = sadd.s32 %s57, 3
    %s70 = scalar_lea.vmem [#allocation2], %s69
    %v71 = vld [vmem:[%s70] sm:$0xff]
    %v72 = vld [vmem:[%s70 + $0x10] sm:$0xff]
    %s73 = sadd.s32 %s57, 4
    %s74 = scalar_lea.vmem [#allocation2], %s73
    %v75 = vld [vmem:[%s74] sm:$0xff]
    %v76 = vld [vmem:[%s74 + $0x10] sm:$0xff]
    %79 = vrot.lane.b32.xlu0 %v63, 32
    %v80 = vpop.permute.xlu0 %79
    %81 = vrot.lane.b32.xlu0 %v64, 32
    %v82 = vpop.permute.xlu0 %81
    %87 = vrot.lane.b32.xlu0 %v67, 64
    %v88 = vpop.permute.xlu0 %87
    %89 = vrot.lane.b32.xlu0 %v68, 64
    %v90 = vpop.permute.xlu0 %89
    %95 = vrot.lane.b32.xlu0 %v71, 96
    %v96 = vpop.permute.xlu0 %95
    %97 = vrot.lane.b32.xlu0 %v72, 96
    %v98 = vpop.permute.xlu0 %97
    %vm101 = vcmask 261120
    %v102 = vsel %vm101, %v59, %v80
    %v103 = vsel %vm101, %v60, %v82
    %vm104 = vcmask 523264
    %v105 = vsel %vm104, %v102, %v88
    %v106 = vsel %vm104, %v103, %v90
    %vm107 = vcmask 785408
    %v108 = vsel %vm107, %v105, %v96
    %v109 = vsel %vm107, %v106, %v98
    %v110 = vld [vmem:[#allocation6] sm:$0xff]
    %v111 = vld [vmem:[#allocation6 + $0x8] sm:$0xff]
    %v112 = vld [vmem:[#allocation6 + $0x10] sm:$0xff]
    %v113 = vld [vmem:[#allocation6 + $0x18] sm:$0xff]
    %v114 = vld [vmem:[#allocation6 + $0x20] sm:$0xff]
    %v115 = vld [vmem:[#allocation6 + $0x28] sm:$0xff]
    %v116 = vld [vmem:[#allocation6 + $0x30] sm:$0xff]
    %v117 = vld [vmem:[#allocation6 + $0x38] sm:$0xff]
    %v118 = vld [vmem:[#allocation6 + $0x40] sm:$0xff]
    %v119 = vld [vmem:[#allocation6 + $0x48] sm:$0xff]
    %v120 = vld [vmem:[#allocation6 + $0x50] sm:$0xff]
    %v121 = vld [vmem:[#allocation6 + $0x58] sm:$0xff]
    %v122 = vld [vmem:[#allocation6 + $0x60] sm:$0xff]
    %v123 = vld [vmem:[#allocation6 + $0x68] sm:$0xff]
    %v124 = vld [vmem:[#allocation6 + $0x70] sm:$0xff]
    %v125 = vld [vmem:[#allocation6 + $0x78] sm:$0xff]
    %v126 = vld [vmem:[#allocation6 + $0x80] sm:$0xff]
    %v127 = vld [vmem:[#allocation6 + $0x88] sm:$0xff]
    %v128 = vld [vmem:[#allocation6 + $0x90] sm:$0xff]
    %v129 = vld [vmem:[#allocation6 + $0x98] sm:$0xff]
    %v130 = vld [vmem:[%s2] sm:$0x1]
    %v132 = vlaneseq
    %v133 = vshrl.u32 %v132, 7
    %v134 = vsub.s32 0, %v133
    %v135 = vrot.slane %v130, %v134
    %v138 = vsel %vm101, %v75, 0
    %v141 = vsel %vm101, %v76, 0
    %143 = vmatprep.subr.mxu0 0.0
    %144 = vmatpush1.msra.mxu0 %v110
    %145 = vmatprep.subr.mxu0 0.0
    %146 = vmatpush1.msra.mxu0 %v111
    %147 = vmatprep.subr.mxu0 0.0
    %148 = vmatpush1.msra.mxu0 %v112
    %149 = vmatprep.subr.mxu0 0.0
    %150 = vmatpush1.msra.mxu0 %v113
    %151 = vmatprep.subr.mxu0 0.0
    %152 = vmatpush1.msra.mxu0 %v114
    %153 = vmatprep.subr.mxu0 0.0
    %154 = vmatpush1.msra.mxu0 %v115
    %155 = vmatprep.subr.mxu0 0.0
    %156 = vmatpush1.msra.mxu0 %v116
    %157 = vmatprep.subr.mxu0 0.0
    %158 = vmatpush1.msra.mxu0 %v117
    %159 = vmatprep.subr.mxu0 0.0
    %160 = vmatpush1.msra.mxu0 %v118
    %161 = vmatprep.subr.mxu0 0.0
    %162 = vmatpush1.msra.mxu0 %v119
    %163 = vmatprep.subr.mxu0 0.0
    %164 = vmatpush1.msra.mxu0 %v120
    %165 = vmatprep.subr.mxu0 0.0
    %166 = vmatpush1.msra.mxu0 %v121
    %167 = vmatprep.subr.mxu0 0.0
    %168 = vmatpush1.msra.mxu0 %v122
    %169 = vmatprep.subr.mxu0 0.0
    %170 = vmatpush1.msra.mxu0 %v123
    %171 = vmatprep.subr.mxu0 0.0
    %172 = vmatpush1.msra.mxu0 %v124
    %173 = vmatprep.subr.mxu0 0.0
    %174 = vmatpush1.msra.mxu0 %v125
    %175 = vmatprep.subr.mxu0 0.0
    %176 = vmatpush1.msra.mxu0 %v126
    %177 = vmatprep.subr.mxu0 0.0
    %178 = vmatpush1.msra.mxu0 %v127
    %179 = vmatprep.subr.mxu0 0.0
    %180 = vmatpush1.msra.mxu0 %v128
    %181 = vmatprep.subr.mxu0 0.0
    %182 = vmatpush1.msra.mxu0 %v129
    %183 = vmatprep.subr.mxu0 0.0
    %184 = vmatpush1.msra.mxu0 0.0
    %185 = vmatprep.subr.mxu0 0.0
    %186 = vmatpush1.msra.mxu0 0.0
    %187 = vmatprep.subr.mxu0 0.0
    %188 = vmatpush1.msra.mxu0 0.0
    %189 = vmatprep.subr.mxu0 0.0
    %190 = vmatpush1.msra.mxu0 0.0
    %191 = vmatprep.subr.mxu0 0.0
    %192 = vmatpush1.msra.mxu0 0.0
    %193 = vmatprep.subr.mxu0 0.0
    %194 = vmatpush1.msra.mxu0 0.0
    %195 = vmatprep.subr.mxu0 0.0
    %196 = vmatpush1.msra.mxu0 0.0
    %197 = vmatprep.subr.mxu0 0.0
    %198 = vmatpush1.msra.mxu0 0.0
    %199 = vmatprep.subr.mxu0 0.0
    %200 = vmatpush1.msra.mxu0 0.0
    %201 = vmatprep.subr.mxu0 0.0
    %202 = vmatpush1.msra.mxu0 0.0
    %203 = vmatprep.subr.mxu0 0.0
    %204 = vmatpush1.msra.mxu0 0.0
    %205 = vmatprep.subr.mxu0 0.0
    %206 = vmatpush1.msra.mxu0 0.0
    %207 = vmatprep.mubr.f32.mxu0 %v138
    %208 = vmatmul.mubr.f32.gmra.mrb[0].mxu0 %v108
    %v209 = vpop.f32.mrb[0].mxu0
    %v210 = vadd.f32 %v135, %v209
    %v211 = vpop.f32.mrb[0].mxu0
    %212 = vmatprep.mubr.f32.mxu0 %v141
    %213 = vmatmul.mubr.f32.gmra.mrb[0].mxu0 %v109
    %v214 = vpop.f32.mrb[0].mxu0
    %v215 = vadd.f32 %v135, %v214
    %v216 = vpop.f32.mrb[0].mxu0
    %217 = vdwg.mxu0
    %218 = vst [vmem:[#allocation8] sm:$0xff] %v210
    %219 = vst [vmem:[#allocation8 + $0x8] sm:$0xff] %v215
    // Predicated region
    $region26: #{tpu_custom_call.1} parent=1 // pred_check
      _
    $region27: #{tpu_custom_call.1} parent=1 // pred_check_branch
      %221 = sbr.rel (0) target = $region29
    $region28: #{tpu_custom_call.1} parent=1 // pred_region
      %s223 = ssub.s32 256, 256
      %224 = vsyncadd [#allocation5], %s223
      %s225 = sshll.u32 [#allocation8], 4
      %s226 = int_to_ptr.vmem [resolvable:$true] %s225
      %231 = dma.vmem_to_hbm [thread:$0]  %s226, 256, %s3, [#allocation5], 128, 128, 8
    $region29: #{tpu_custom_call.1} parent=1 // pred_fallthru
      _
    // Predicated region
    $region30: #{tpu_custom_call.1} parent=1 // pred_check
      _
    $region31: #{tpu_custom_call.1} parent=1 // pred_check_branch
      %233 = sbr.rel (0) target = $region33
    $region32: #{tpu_custom_call.1} parent=1 // pred_region
      %234 = dma.done [#allocation5], 256
    $region33: #{tpu_custom_call.1} parent=1 // pred_fallthru
      _
    %235 = vsyncpa [#allocation4], 1
    %236 = vsyncpa [#allocation7], 1
    %237 = vsyncpa [#allocation5], 1

// kernel: tpu_custom_call.1
$region0: #{tpu_custom_call.1}
  #allocation0 [shape = 'u32[]', space=smem, size = 0x4, offset = 0x4, fixed_abs, tag = 'smem constant byte address 0x4 - core index']
  #allocation1 [shape = 'u32[144,128]{1,0:T(1,128)}', space=vmem, size = 0x12000, scoped, tag = 'internal scratch']
  #allocation2 [shape = 'f32[2,12,32]{2,1,0:T(8,128)}', space=vmem, size = 0x4000, scoped, tag = 'scratch operand']
  %s0 = inlined_call_operand.hbm [shape: f32[2,8,32], index: 0, kind: input, shape index: {}]
  %s1 = inlined_call_operand.hbm [shape: f32[5,32,128], index: 1, kind: input, shape index: {}]
  %s2 = inlined_call_operand.vmem [shape: f32[1,128], index: 2, kind: input, shape index: {}]
  %s3 = inlined_call_operand.hbm [shape: f32[2,8,128], index: 3, kind: output, shape index: {}]
  %s4 = sld [smem:[#allocation0]]
  $region34: #{tpu_custom_call.1} parent=0
    _
  %s6 = ssub.s32 1, %s4
  %s7 = scalar_select 0, %s6, %s4
  $region1: #{tpu_custom_call.1} parent=0
    #allocation3 [shape = 'u8[8192]{0}', space=vmem, size = 0x2000, scoped, tag = 'input window, operand 0, single buffered']
    #allocation4 [shape = 's32[1]{0}', space=sflag, size = 0x4, scoped, tag = 'scoped memory for tpu_custom_call.1']
    #allocation5 [shape = 's32[1]{0}', space=sflag, size = 0x4, scoped, tag = 'scoped memory for tpu_custom_call.1']
    #allocation6 [shape = 'u8[81920]{0}', space=vmem, size = 0x14000, scoped, tag = 'input window, operand 1, single buffered']
    #allocation7 [shape = 's32[1]{0}', space=sflag, size = 0x4, scoped, tag = 'scoped memory for tpu_custom_call.1']
    #allocation8 [shape = 'u8[8192]{0}', space=vmem, size = 0x2000, scoped, tag = 'output window, operand 0, single buffered']
    %8 = vsyncpa [#allocation4], 0
    %9 = vsyncpa [#allocation7], 0
    %10 = vsyncpa [#allocation5], 0
    // Predicated region
    $region2: #{tpu_custom_call.1} parent=1 // pred_check
      _
    $region3: #{tpu_custom_call.1} parent=1 // pred_check_branch
      %12 = sbr.rel (0) target = $region5
    $region4: #{tpu_custom_call.1} parent=1 // pred_region
      %s14 = ssub.s32 256, 256
      %15 = vsyncadd [#allocation4], %s14
      %s16 = sshll.u32 [#allocation3], 4
      %s17 = int_to_ptr.vmem [resolvable:$true] %s16
      %22 = dma.hbm_to_vmem [thread:$0]  %s0, 256, %s17, [#allocation4], 128, 128, 8
    $region5: #{tpu_custom_call.1} parent=1 // pred_fallthru
      _
    // Predicated region
    $region6: #{tpu_custom_call.1} parent=1 // pred_check
      _
    $region7: #{tpu_custom_call.1} parent=1 // pred_check_branch
      %24 = sbr.rel (0) target = $region9
    $region8: #{tpu_custom_call.1} parent=1 // pred_region
      %s26 = ssub.s32 2560, 2560
      %27 = vsyncadd [#allocation7], %s26
      %s28 = sshll.u32 [#allocation6], 4
      %s29 = int_to_ptr.vmem [resolvable:$true] %s28
      %34 = dma.hbm_to_vmem [thread:$0]  %s1, 2560, %s29, [#allocation7], 128, 128, 8
    $region9: #{tpu_custom_call.1} parent=1 // pred_fallthru
      _
    // Predicated region
    $region10: #{tpu_custom_call.1} parent=1 // pred_check
      _
    $region11: #{tpu_custom_call.1} parent=1 // pred_check_branch
      %36 = sbr.rel (0) target = $region13
    $region12: #{tpu_custom_call.1} parent=1 // pred_region
      _
    $region13: #{tpu_custom_call.1} parent=1 // pred_fallthru
      _
    // Predicated region
    $region14: #{tpu_custom_call.1} parent=1 // pred_check
      _
    $region15: #{tpu_custom_call.1} parent=1 // pred_check_branch
      %38 = sbr.rel (0) target = $region17
    $region16: #{tpu_custom_call.1} parent=1 // pred_region
      %39 = dma.done [#allocation4], 256
    $region17: #{tpu_custom_call.1} parent=1 // pred_fallthru
      _
    // Predicated region
    $region18: #{tpu_custom_call.1} parent=1 // pred_check
      _
    $region19: #{tpu_custom_call.1} parent=1 // pred_check_branch
      %41 = sbr.rel (0) target = $region21
    $region20: #{tpu_custom_call.1} parent=1 // pred_region
      %42 = dma.done [#allocation7], 2560
    $region21: #{tpu_custom_call.1} parent=1 // pred_fallthru
      _
    %p43 = scmp.eq.s32.totalorder 0, 0
    // Predicated region
    $region22: #{tpu_custom_call.1} parent=1 // pred_check
      %p44 = pneg %p43
    $region23: #{tpu_custom_call.1} parent=1 // pred_check_branch
      %46 = sbr.rel (%p44) target = $region25
    $region24: #{tpu_custom_call.1} parent=1 // pred_region
      %vm47 = vcmask 261120
      %48 = vst.msk [vmem:[#allocation2] sm:$0xff] %vm47, 0.0
      %vm49 = vcmask 257024
      %50 = vst.msk [vmem:[#allocation2 + $0x8] sm:$0xf] %vm49, 0.0
      %51 = vst.msk [vmem:[#allocation2 + $0x10] sm:$0xff] %vm47, 0.0
      %52 = vst.msk [vmem:[#allocation2 + $0x18] sm:$0xf] %vm49, 0.0
      %v53 = vld [vmem:[#allocation3] sm:$0xff]
      %v54 = vld [vmem:[#allocation3 + $0x8] sm:$0xff]
      %55 = vst.msk [vmem:[#allocation2 + $0x2] sm:$0xff] %vm47, %v53
      %56 = vst.msk [vmem:[#allocation2 + $0x12] sm:$0xff] %vm47, %v54
    $region25: #{tpu_custom_call.1} parent=1 // pred_fallthru
      _
    %s57 = smul.u32 0, 8
    %v58 = vld [vmem:[%s2] sm:$0x1]
    %v60 = vlaneseq
    %v61 = vshrl.u32 %v60, 7
    %v62 = vsub.s32 0, %v61
    %v63 = vrot.slane %v58, %v62
    %s65 = scalar_lea.vmem [#allocation2], %s57
    %v66 = vld [vmem:[%s65] sm:$0xff]
    %v67 = vld [vmem:[%s65 + $0x10] sm:$0xff]
    %v68 = vld [vmem:[#allocation6] sm:$0xff]
    %v69 = vld [vmem:[#allocation6 + $0x8] sm:$0xff]
    %v70 = vld [vmem:[#allocation6 + $0x10] sm:$0xff]
    %v71 = vld [vmem:[#allocation6 + $0x18] sm:$0xff]
    %vm72 = vcmask 261120
    %v74 = vsel %vm72, %v66, 0
    %v77 = vsel %vm72, %v67, 0
    %79 = vmatprep.subr.mxu0 0.0
    %80 = vmatpush1.msra.mxu0 %v68
    %81 = vmatprep.subr.mxu0 0.0
    %82 = vmatpush1.msra.mxu0 %v69
    %83 = vmatprep.subr.mxu0 0.0
    %84 = vmatpush1.msra.mxu0 %v70
    %85 = vmatprep.subr.mxu0 0.0
    %86 = vmatpush1.msra.mxu0 %v71
    %87 = vmatprep.subr.mxu0 0.0
    %88 = vmatpush1.msra.mxu0 0.0
    %89 = vmatprep.subr.mxu0 0.0
    %90 = vmatpush1.msra.mxu0 0.0
    %91 = vmatprep.subr.mxu0 0.0
    %92 = vmatpush1.msra.mxu0 0.0
    %93 = vmatprep.subr.mxu0 0.0
    %94 = vmatpush1.msra.mxu0 0.0
    %95 = vmatprep.subr.mxu0 0.0
    %96 = vmatpush1.msra.mxu0 0.0
    %97 = vmatprep.subr.mxu0 0.0
    %98 = vmatpush1.msra.mxu0 0.0
    %99 = vmatprep.subr.mxu0 0.0
    %100 = vmatpush1.msra.mxu0 0.0
    %101 = vmatprep.subr.mxu0 0.0
    %102 = vmatpush1.msra.mxu0 0.0
    %103 = vmatprep.subr.mxu0 0.0
    %104 = vmatpush1.msra.mxu0 0.0
    %105 = vmatprep.subr.mxu0 0.0
    %106 = vmatpush1.msra.mxu0 0.0
    %107 = vmatprep.subr.mxu0 0.0
    %108 = vmatpush1.msra.mxu0 0.0
    %109 = vmatprep.subr.mxu0 0.0
    %110 = vmatpush1.msra.mxu0 0.0
    %111 = vmatprep.subr.mxu0 0.0
    %112 = vmatpush1.msra.mxu0 0.0
    %113 = vmatprep.subr.mxu0 0.0
    %114 = vmatpush1.msra.mxu0 0.0
    %115 = vmatprep.subr.mxu0 0.0
    %116 = vmatpush1.msra.mxu0 0.0
    %117 = vmatprep.subr.mxu0 0.0
    %118 = vmatpush1.msra.mxu0 0.0
    %119 = vmatprep.subr.mxu0 0.0
    %120 = vmatpush1.msra.mxu0 0.0
    %121 = vmatprep.subr.mxu0 0.0
    %122 = vmatpush1.msra.mxu0 0.0
    %123 = vmatprep.subr.mxu0 0.0
    %124 = vmatpush1.msra.mxu0 0.0
    %125 = vmatprep.subr.mxu0 0.0
    %126 = vmatpush1.msra.mxu0 0.0
    %127 = vmatprep.subr.mxu0 0.0
    %128 = vmatpush1.msra.mxu0 0.0
    %129 = vmatprep.subr.mxu0 0.0
    %130 = vmatpush1.msra.mxu0 0.0
    %131 = vmatprep.subr.mxu0 0.0
    %132 = vmatpush1.msra.mxu0 0.0
    %133 = vmatprep.subr.mxu0 0.0
    %134 = vmatpush1.msra.mxu0 0.0
    %135 = vmatprep.subr.mxu0 0.0
    %136 = vmatpush1.msra.mxu0 0.0
    %137 = vmatprep.subr.mxu0 0.0
    %138 = vmatpush1.msra.mxu0 0.0
    %139 = vmatprep.subr.mxu0 0.0
    %140 = vmatpush1.msra.mxu0 0.0
    %141 = vmatprep.subr.mxu0 0.0
    %142 = vmatpush1.msra.mxu0 0.0
    %143 = vmatprep.mubr.f32.mxu0 0.0
    %144 = vmatmul.mubr.f32.gmra.mrb[0].mxu0 %v74
    %v145 = vpop.f32.mrb[0].mxu0
    %v146 = vadd.f32 0.0, %v145
    %v147 = vpop.f32.mrb[0].mxu0
    %148 = vmatprep.mubr.f32.mxu0 0.0
    %149 = vmatmul.mubr.f32.gmra.mrb[0].mxu0 %v77
    %v150 = vpop.f32.mrb[0].mxu0
    %v151 = vadd.f32 0.0, %v150
    %v152 = vpop.f32.mrb[0].mxu0
    %153 = vdwg.mxu0
    %v154 = vadd.f32 %v63, %v146
    %v155 = vadd.f32 %v63, %v151
    %s156 = sadd.s32 %s57, 1
    %s157 = scalar_lea.vmem [#allocation2], %s156
    %v158 = vld [vmem:[%s157] sm:$0xff]
    %v159 = vld [vmem:[%s157 + $0x10] sm:$0xff]
    %s160 = scalar_lea.vmem [#allocation6], 32
    %v161 = vld [vmem:[%s160] sm:$0xff]
    %v162 = vld [vmem:[%s160 + $0x8] sm:$0xff]
    %v163 = vld [vmem:[%s160 + $0x10] sm:$0xff]
    %v164 = vld [vmem:[%s160 + $0x18] sm:$0xff]
    %v166 = vsel %vm72, %v158, 0
    %v169 = vsel %vm72, %v159, 0
    %171 = vmatprep.subr.mxu0 0.0
    %172 = vmatpush1.msra.mxu0 %v161
    %173 = vmatprep.subr.mxu0 0.0
    %174 = vmatpush1.msra.mxu0 %v162
    %175 = vmatprep.subr.mxu0 0.0
    %176 = vmatpush1.msra.mxu0 %v163
    %177 = vmatprep.subr.mxu0 0.0
    %178 = vmatpush1.msra.mxu0 %v164
    %179 = vmatprep.subr.mxu0 0.0
    %180 = vmatpush1.msra.mxu0 0.0
    %181 = vmatprep.subr.mxu0 0.0
    %182 = vmatpush1.msra.mxu0 0.0
    %183 = vmatprep.subr.mxu0 0.0
    %184 = vmatpush1.msra.mxu0 0.0
    %185 = vmatprep.subr.mxu0 0.0
    %186 = vmatpush1.msra.mxu0 0.0
    %187 = vmatprep.subr.mxu0 0.0
    %188 = vmatpush1.msra.mxu0 0.0
    %189 = vmatprep.subr.mxu0 0.0
    %190 = vmatpush1.msra.mxu0 0.0
    %191 = vmatprep.subr.mxu0 0.0
    %192 = vmatpush1.msra.mxu0 0.0
    %193 = vmatprep.subr.mxu0 0.0
    %194 = vmatpush1.msra.mxu0 0.0
    %195 = vmatprep.subr.mxu0 0.0
    %196 = vmatpush1.msra.mxu0 0.0
    %197 = vmatprep.subr.mxu0 0.0
    %198 = vmatpush1.msra.mxu0 0.0
    %199 = vmatprep.subr.mxu0 0.0
    %200 = vmatpush1.msra.mxu0 0.0
    %201 = vmatprep.subr.mxu0 0.0
    %202 = vmatpush1.msra.mxu0 0.0
    %203 = vmatprep.subr.mxu0 0.0
    %204 = vmatpush1.msra.mxu0 0.0
    %205 = vmatprep.subr.mxu0 0.0
    %206 = vmatpush1.msra.mxu0 0.0
    %207 = vmatprep.subr.mxu0 0.0
    %208 = vmatpush1.msra.mxu0 0.0
    %209 = vmatprep.subr.mxu0 0.0
    %210 = vmatpush1.msra.mxu0 0.0
    %211 = vmatprep.subr.mxu0 0.0
    %212 = vmatpush1.msra.mxu0 0.0
    %213 = vmatprep.subr.mxu0 0.0
    %214 = vmatpush1.msra.mxu0 0.0
    %215 = vmatprep.subr.mxu0 0.0
    %216 = vmatpush1.msra.mxu0 0.0
    %217 = vmatprep.subr.mxu0 0.0
    %218 = vmatpush1.msra.mxu0 0.0
    %219 = vmatprep.subr.mxu0 0.0
    %220 = vmatpush1.msra.mxu0 0.0
    %221 = vmatprep.subr.mxu0 0.0
    %222 = vmatpush1.msra.mxu0 0.0
    %223 = vmatprep.subr.mxu0 0.0
    %224 = vmatpush1.msra.mxu0 0.0
    %225 = vmatprep.subr.mxu0 0.0
    %226 = vmatpush1.msra.mxu0 0.0
    %227 = vmatprep.subr.mxu0 0.0
    %228 = vmatpush1.msra.mxu0 0.0
    %229 = vmatprep.subr.mxu0 0.0
    %230 = vmatpush1.msra.mxu0 0.0
    %231 = vmatprep.subr.mxu0 0.0
    %232 = vmatpush1.msra.mxu0 0.0
    %233 = vmatprep.subr.mxu0 0.0
    %234 = vmatpush1.msra.mxu0 0.0
    %235 = vmatprep.mubr.f32.mxu0 0.0
    %236 = vmatmul.mubr.f32.gmra.mrb[0].mxu0 %v166
    %v237 = vpop.f32.mrb[0].mxu0
    %v238 = vadd.f32 0.0, %v237
    %v239 = vpop.f32.mrb[0].mxu0
    %240 = vmatprep.mubr.f32.mxu0 0.0
    %241 = vmatmul.mubr.f32.gmra.mrb[0].mxu0 %v169
    %v242 = vpop.f32.mrb[0].mxu0
    %v243 = vadd.f32 0.0, %v242
    %v244 = vpop.f32.mrb[0].mxu0
    %245 = vdwg.mxu0
    %v246 = vadd.f32 %v154, %v238
    %v247 = vadd.f32 %v155, %v243
    %s248 = sadd.s32 %s57, 2
    %s249 = scalar_lea.vmem [#allocation2], %s248
    %v250 = vld [vmem:[%s249] sm:$0xff]
    %v251 = vld [vmem:[%s249 + $0x10] sm:$0xff]
    %s252 = scalar_lea.vmem [#allocation6], 64
    %v253 = vld [vmem:[%s252] sm:$0xff]
    %v254 = vld [vmem:[%s252 + $0x8] sm:$0xff]
    %v255 = vld [vmem:[%s252 + $0x10] sm:$0xff]
    %v256 = vld [vmem:[%s252 + $0x18] sm:$0xff]
    %v258 = vsel %vm72, %v250, 0
    %v261 = vsel %vm72, %v251, 0
    %263 = vmatprep.subr.mxu0 0.0
    %264 = vmatpush1.msra.mxu0 %v253
    %265 = vmatprep.subr.mxu0 0.0
    %266 = vmatpush1.msra.mxu0 %v254
    %267 = vmatprep.subr.mxu0 0.0
    %268 = vmatpush1.msra.mxu0 %v255
    %269 = vmatprep.subr.mxu0 0.0
    %270 = vmatpush1.msra.mxu0 %v256
    %271 = vmatprep.subr.mxu0 0.0
    %272 = vmatpush1.msra.mxu0 0.0
    %273 = vmatprep.subr.mxu0 0.0
    %274 = vmatpush1.msra.mxu0 0.0
    %275 = vmatprep.subr.mxu0 0.0
    %276 = vmatpush1.msra.mxu0 0.0
    %277 = vmatprep.subr.mxu0 0.0
    %278 = vmatpush1.msra.mxu0 0.0
    %279 = vmatprep.subr.mxu0 0.0
    %280 = vmatpush1.msra.mxu0 0.0
    %281 = vmatprep.subr.mxu0 0.0
    %282 = vmatpush1.msra.mxu0 0.0
    %283 = vmatprep.subr.mxu0 0.0
    %284 = vmatpush1.msra.mxu0 0.0
    %285 = vmatprep.subr.mxu0 0.0
    %286 = vmatpush1.msra.mxu0 0.0
    %287 = vmatprep.subr.mxu0 0.0
    %288 = vmatpush1.msra.mxu0 0.0
    %289 = vmatprep.subr.mxu0 0.0
    %290 = vmatpush1.msra.mxu0 0.0
    %291 = vmatprep.subr.mxu0 0.0
    %292 = vmatpush1.msra.mxu0 0.0
    %293 = vmatprep.subr.mxu0 0.0
    %294 = vmatpush1.msra.mxu0 0.0
    %295 = vmatprep.subr.mxu0 0.0
    %296 = vmatpush1.msra.mxu0 0.0
    %297 = vmatprep.subr.mxu0 0.0
    %298 = vmatpush1.msra.mxu0 0.0
    %299 = vmatprep.subr.mxu0 0.0
    %300 = vmatpush1.msra.mxu0 0.0
    %301 = vmatprep.subr.mxu0 0.0
    %302 = vmatpush1.msra.mxu0 0.0
    %303 = vmatprep.subr.mxu0 0.0
    %304 = vmatpush1.msra.mxu0 0.0
    %305 = vmatprep.subr.mxu0 0.0
    %306 = vmatpush1.msra.mxu0 0.0
    %307 = vmatprep.subr.mxu0 0.0
    %308 = vmatpush1.msra.mxu0 0.0
    %309 = vmatprep.subr.mxu0 0.0
    %310 = vmatpush1.msra.mxu0 0.0
    %311 = vmatprep.subr.mxu0 0.0
    %312 = vmatpush1.msra.mxu0 0.0
    %313 = vmatprep.subr.mxu0 0.0
    %314 = vmatpush1.msra.mxu0 0.0
    %315 = vmatprep.subr.mxu0 0.0
    %316 = vmatpush1.msra.mxu0 0.0
    %317 = vmatprep.subr.mxu0 0.0
    %318 = vmatpush1.msra.mxu0 0.0
    %319 = vmatprep.subr.mxu0 0.0
    %320 = vmatpush1.msra.mxu0 0.0
    %321 = vmatprep.subr.mxu0 0.0
    %322 = vmatpush1.msra.mxu0 0.0
    %323 = vmatprep.subr.mxu0 0.0
    %324 = vmatpush1.msra.mxu0 0.0
    %325 = vmatprep.subr.mxu0 0.0
    %326 = vmatpush1.msra.mxu0 0.0
    %327 = vmatprep.mubr.f32.mxu0 0.0
    %328 = vmatmul.mubr.f32.gmra.mrb[0].mxu0 %v258
    %v329 = vpop.f32.mrb[0].mxu0
    %v330 = vadd.f32 0.0, %v329
    %v331 = vpop.f32.mrb[0].mxu0
    %332 = vmatprep.mubr.f32.mxu0 0.0
    %333 = vmatmul.mubr.f32.gmra.mrb[0].mxu0 %v261
    %v334 = vpop.f32.mrb[0].mxu0
    %v335 = vadd.f32 0.0, %v334
    %v336 = vpop.f32.mrb[0].mxu0
    %337 = vdwg.mxu0
    %v338 = vadd.f32 %v246, %v330
    %v339 = vadd.f32 %v247, %v335
    %s340 = sadd.s32 %s57, 3
    %s341 = scalar_lea.vmem [#allocation2], %s340
    %v342 = vld [vmem:[%s341] sm:$0xff]
    %v343 = vld [vmem:[%s341 + $0x10] sm:$0xff]
    %s344 = scalar_lea.vmem [#allocation6], 96
    %v345 = vld [vmem:[%s344] sm:$0xff]
    %v346 = vld [vmem:[%s344 + $0x8] sm:$0xff]
    %v347 = vld [vmem:[%s344 + $0x10] sm:$0xff]
    %v348 = vld [vmem:[%s344 + $0x18] sm:$0xff]
    %v350 = vsel %vm72, %v342, 0
    %v353 = vsel %vm72, %v343, 0
    %355 = vmatprep.subr.mxu0 0.0
    %356 = vmatpush1.msra.mxu0 %v345
    %357 = vmatprep.subr.mxu0 0.0
    %358 = vmatpush1.msra.mxu0 %v346
    %359 = vmatprep.subr.mxu0 0.0
    %360 = vmatpush1.msra.mxu0 %v347
    %361 = vmatprep.subr.mxu0 0.0
    %362 = vmatpush1.msra.mxu0 %v348
    %363 = vmatprep.subr.mxu0 0.0
    %364 = vmatpush1.msra.mxu0 0.0
    %365 = vmatprep.subr.mxu0 0.0
    %366 = vmatpush1.msra.mxu0 0.0
    %367 = vmatprep.subr.mxu0 0.0
    %368 = vmatpush1.msra.mxu0 0.0
    %369 = vmatprep.subr.mxu0 0.0
    %370 = vmatpush1.msra.mxu0 0.0
    %371 = vmatprep.subr.mxu0 0.0
    %372 = vmatpush1.msra.mxu0 0.0
    %373 = vmatprep.subr.mxu0 0.0
    %374 = vmatpush1.msra.mxu0 0.0
    %375 = vmatprep.subr.mxu0 0.0
    %376 = vmatpush1.msra.mxu0 0.0
    %377 = vmatprep.subr.mxu0 0.0
    %378 = vmatpush1.msra.mxu0 0.0
    %379 = vmatprep.subr.mxu0 0.0
    %380 = vmatpush1.msra.mxu0 0.0
    %381 = vmatprep.subr.mxu0 0.0
    %382 = vmatpush1.msra.mxu0 0.0
    %383 = vmatprep.subr.mxu0 0.0
    %384 = vmatpush1.msra.mxu0 0.0
    %385 = vmatprep.subr.mxu0 0.0
    %386 = vmatpush1.msra.mxu0 0.0
    %387 = vmatprep.subr.mxu0 0.0
    %388 = vmatpush1.msra.mxu0 0.0
    %389 = vmatprep.subr.mxu0 0.0
    %390 = vmatpush1.msra.mxu0 0.0
    %391 = vmatprep.subr.mxu0 0.0
    %392 = vmatpush1.msra.mxu0 0.0
    %393 = vmatprep.subr.mxu0 0.0
    %394 = vmatpush1.msra.mxu0 0.0
    %395 = vmatprep.subr.mxu0 0.0
    %396 = vmatpush1.msra.mxu0 0.0
    %397 = vmatprep.subr.mxu0 0.0
    %398 = vmatpush1.msra.mxu0 0.0
    %399 = vmatprep.subr.mxu0 0.0
    %400 = vmatpush1.msra.mxu0 0.0
    %401 = vmatprep.subr.mxu0 0.0
    %402 = vmatpush1.msra.mxu0 0.0
    %403 = vmatprep.subr.mxu0 0.0
    %404 = vmatpush1.msra.mxu0 0.0
    %405 = vmatprep.subr.mxu0 0.0
    %406 = vmatpush1.msra.mxu0 0.0
    %407 = vmatprep.subr.mxu0 0.0
    %408 = vmatpush1.msra.mxu0 0.0
    %409 = vmatprep.subr.mxu0 0.0
    %410 = vmatpush1.msra.mxu0 0.0
    %411 = vmatprep.subr.mxu0 0.0
    %412 = vmatpush1.msra.mxu0 0.0
    %413 = vmatprep.subr.mxu0 0.0
    %414 = vmatpush1.msra.mxu0 0.0
    %415 = vmatprep.subr.mxu0 0.0
    %416 = vmatpush1.msra.mxu0 0.0
    %417 = vmatprep.subr.mxu0 0.0
    %418 = vmatpush1.msra.mxu0 0.0
    %419 = vmatprep.mubr.f32.mxu0 0.0
    %420 = vmatmul.mubr.f32.gmra.mrb[0].mxu0 %v350
    %v421 = vpop.f32.mrb[0].mxu0
    %v422 = vadd.f32 0.0, %v421
    %v423 = vpop.f32.mrb[0].mxu0
    %424 = vmatprep.mubr.f32.mxu0 0.0
    %425 = vmatmul.mubr.f32.gmra.mrb[0].mxu0 %v353
    %v426 = vpop.f32.mrb[0].mxu0
    %v427 = vadd.f32 0.0, %v426
    %v428 = vpop.f32.mrb[0].mxu0
    %429 = vdwg.mxu0
    %v430 = vadd.f32 %v338, %v422
    %v431 = vadd.f32 %v339, %v427
    %s432 = sadd.s32 %s57, 4
    %s433 = scalar_lea.vmem [#allocation2], %s432
    %v434 = vld [vmem:[%s433] sm:$0xff]
    %v435 = vld [vmem:[%s433 + $0x10] sm:$0xff]
    %s436 = scalar_lea.vmem [#allocation6], 128
    %v437 = vld [vmem:[%s436] sm:$0xff]
    %v438 = vld [vmem:[%s436 + $0x8] sm:$0xff]
    %v439 = vld [vmem:[%s436 + $0x10] sm:$0xff]
    %v440 = vld [vmem:[%s436 + $0x18] sm:$0xff]
    %v442 = vsel %vm72, %v434, 0
    %v445 = vsel %vm72, %v435, 0
    %447 = vmatprep.subr.mxu0 0.0
    %448 = vmatpush1.msra.mxu0 %v437
    %449 = vmatprep.subr.mxu0 0.0
    %450 = vmatpush1.msra.mxu0 %v438
    %451 = vmatprep.subr.mxu0 0.0
    %452 = vmatpush1.msra.mxu0 %v439
    %453 = vmatprep.subr.mxu0 0.0
    %454 = vmatpush1.msra.mxu0 %v440
    %455 = vmatprep.subr.mxu0 0.0
    %456 = vmatpush1.msra.mxu0 0.0
    %457 = vmatprep.subr.mxu0 0.0
    %458 = vmatpush1.msra.mxu0 0.0
    %459 = vmatprep.subr.mxu0 0.0
    %460 = vmatpush1.msra.mxu0 0.0
    %461 = vmatprep.subr.mxu0 0.0
    %462 = vmatpush1.msra.mxu0 0.0
    %463 = vmatprep.subr.mxu0 0.0
    %464 = vmatpush1.msra.mxu0 0.0
    %465 = vmatprep.subr.mxu0 0.0
    %466 = vmatpush1.msra.mxu0 0.0
    %467 = vmatprep.subr.mxu0 0.0
    %468 = vmatpush1.msra.mxu0 0.0
    %469 = vmatprep.subr.mxu0 0.0
    %470 = vmatpush1.msra.mxu0 0.0
    %471 = vmatprep.subr.mxu0 0.0
    %472 = vmatpush1.msra.mxu0 0.0
    %473 = vmatprep.subr.mxu0 0.0
    %474 = vmatpush1.msra.mxu0 0.0
    %475 = vmatprep.subr.mxu0 0.0
    %476 = vmatpush1.msra.mxu0 0.0
    %477 = vmatprep.subr.mxu0 0.0
    %478 = vmatpush1.msra.mxu0 0.0
    %479 = vmatprep.subr.mxu0 0.0
    %480 = vmatpush1.msra.mxu0 0.0
    %481 = vmatprep.subr.mxu0 0.0
    %482 = vmatpush1.msra.mxu0 0.0
    %483 = vmatprep.subr.mxu0 0.0
    %484 = vmatpush1.msra.mxu0 0.0
    %485 = vmatprep.subr.mxu0 0.0
    %486 = vmatpush1.msra.mxu0 0.0
    %487 = vmatprep.subr.mxu0 0.0
    %488 = vmatpush1.msra.mxu0 0.0
    %489 = vmatprep.subr.mxu0 0.0
    %490 = vmatpush1.msra.mxu0 0.0
    %491 = vmatprep.subr.mxu0 0.0
    %492 = vmatpush1.msra.mxu0 0.0
    %493 = vmatprep.subr.mxu0 0.0
    %494 = vmatpush1.msra.mxu0 0.0
    %495 = vmatprep.subr.mxu0 0.0
    %496 = vmatpush1.msra.mxu0 0.0
    %497 = vmatprep.subr.mxu0 0.0
    %498 = vmatpush1.msra.mxu0 0.0
    %499 = vmatprep.subr.mxu0 0.0
    %500 = vmatpush1.msra.mxu0 0.0
    %501 = vmatprep.subr.mxu0 0.0
    %502 = vmatpush1.msra.mxu0 0.0
    %503 = vmatprep.subr.mxu0 0.0
    %504 = vmatpush1.msra.mxu0 0.0
    %505 = vmatprep.subr.mxu0 0.0
    %506 = vmatpush1.msra.mxu0 0.0
    %507 = vmatprep.subr.mxu0 0.0
    %508 = vmatpush1.msra.mxu0 0.0
    %509 = vmatprep.subr.mxu0 0.0
    %510 = vmatpush1.msra.mxu0 0.0
    %511 = vmatprep.mubr.f32.mxu0 0.0
    %512 = vmatmul.mubr.f32.gmra.mrb[0].mxu0 %v442
    %v513 = vpop.f32.mrb[0].mxu0
    %v514 = vadd.f32 0.0, %v513
    %v515 = vpop.f32.mrb[0].mxu0
    %516 = vmatprep.mubr.f32.mxu0 0.0
    %517 = vmatmul.mubr.f32.gmra.mrb[0].mxu0 %v445
    %v518 = vpop.f32.mrb[0].mxu0
    %v519 = vadd.f32 0.0, %v518
    %v520 = vpop.f32.mrb[0].mxu0
    %521 = vdwg.mxu0
    %v522 = vadd.f32 %v430, %v514
    %v523 = vadd.f32 %v431, %v519
    %524 = vst [vmem:[#allocation8] sm:$0xff] %v522
    %525 = vst [vmem:[#allocation8 + $0x8] sm:$0xff] %v523
    // Predicated region
    $region26: #{tpu_custom_call.1} parent=1 // pred_check
      _
    $region27: #{tpu_custom_call.1} parent=1 // pred_check_branch
      %527 = sbr.rel (0) target = $region29
    $region28: #{tpu_custom_call.1} parent=1 // pred_region
      %s529 = ssub.s32 256, 256
      %530 = vsyncadd [#allocation5], %s529
      %s531 = sshll.u32 [#allocation8], 4
      %s532 = int_to_ptr.vmem [resolvable:$true] %s531
      %537 = dma.vmem_to_hbm [thread:$0]  %s532, 256, %s3, [#allocation5], 128, 128, 8
    $region29: #{tpu_custom_call.1} parent=1 // pred_fallthru
      _
    // Predicated region
    $region30: #{tpu_custom_call.1} parent=1 // pred_check
      _
    $region31: #{tpu_custom_call.1} parent=1 // pred_check_branch
      %539 = sbr.rel (0) target = $region33
    $region32: #{tpu_custom_call.1} parent=1 // pred_region
      %540 = dma.done [#allocation5], 256
    $region33: #{tpu_custom_call.1} parent=1 // pred_fallthru
      _
    %541 = vsyncpa [#allocation4], 1
    %542 = vsyncpa [#allocation7], 1
    %543 = vsyncpa [#allocation5], 1

</llo_original>
